<compile_context>
chip_gen: v5e
topology: v5e:2x2
jax: 0.10.0
libtpu: 0.0.40
codegen_flags: <defaults>
</compile_context>

<pallas_src>
import functools

import jax
import jax.numpy as jnp
from jax.experimental import pallas as pl
from jax.experimental.pallas import tpu as pltpu

F_ALPHA = 0.25   # config.model.F_ALPHA
F_GAMMA = 2.0    # config.model.F_GAMMA (statically 2 -> repeated multiply)

LANES = 128

# Loss-neutral padding values: with x=+1e4, t=1 the stable BCE is exactly 0 in
# f32, so pt=1, (1-pt)=0 and focal=0 -> padded elements contribute nothing.
_PAD_X = 1.0e4
_PAD_T = 1.0


def _cdiv(a: int, b: int) -> int:
    return -(-a // b)


def _round_up(a: int, b: int) -> int:
    return _cdiv(a, b) * b


def _sublane_multiple(dtype) -> int:
    """Row-tiling alignment so sub-32-bit dtypes keep their packed layout."""
    size = jnp.dtype(dtype).itemsize
    if size >= 4:
        return 8
    if size == 2:
        return 16
    return 32


def _chip_config():
    """Return (num_cores, max_tile_rows, vmem_limit_bytes) for the local TPU."""
    vmem_bytes = None
    try:
        info = pltpu.get_tpu_info()
        vmem_bytes = getattr(info, "vmem_capacity_bytes", None)
    except Exception:
        vmem_bytes = None
    kind = ""
    try:
        kind = jax.devices()[0].device_kind.lower()
    except Exception:
        kind = ""
    if not vmem_bytes:
        vmem_bytes = 64 * 1024 * 1024   # conservative: v7x per-TC VMEM

    # Megacore chips (2 TensorCores behind one device): v4 / v5p / v7x.
    num_cores = 2 if any(s in kind for s in ("v4", "v5p", "v7")) else 1

    if vmem_bytes >= 128 * 1024 * 1024:     # v5e / v6e
        max_tile_rows = 16384               # 8 MiB per f32 input block
        vmem_limit = 64 * 1024 * 1024
    else:                                   # v7x (64 MiB / TC) or unknown
        max_tile_rows = 8192                # 4 MiB per f32 input block
        vmem_limit = 40 * 1024 * 1024
    return num_cores, max_tile_rows, vmem_limit


def _focal_loss_kernel(x_ref, t_ref, out_ref, acc_ref, *, tile_rows, num_tiles):
    i = pl.program_id(1)   # tile index within this core's row range

    @pl.when(i == 0)
    def _():
        acc_ref[...] = jnp.zeros_like(acc_ref)

    x = x_ref[...].astype(jnp.float32)
    t = t_ref[...].astype(jnp.float32)

    # Numerically-stable BCE with logits (matches
    # F.binary_cross_entropy_with_logits, reduction='none'):
    #   bce = max(x, 0) - x*t + log1p(exp(-|x|))
    bce = jnp.maximum(x, 0.0) - x * t + jnp.log1p(jnp.exp(-jnp.abs(x)))

    pt = jnp.exp(-bce)
    alpha_w = (1.0 - F_ALPHA) * t + F_ALPHA * (1.0 - t)
    one_m_pt = 1.0 - pt
    # gamma == 2.0 statically: plain multiply, no jnp.power (EUP exp/log).
    focal = alpha_w * (one_m_pt * one_m_pt) * bce

    # Fold the tile into a single-vreg accumulator: layout-preserving reshape
    # (tile_rows,128)->(tile_rows//8,8,128) + pure-VPU adds. No full-tile RMW.
    acc_ref[...] += jnp.sum(focal.reshape(tile_rows // 8, 8, LANES), axis=0)

    @pl.when(i == num_tiles - 1)
    def _():
        # Single cross-lane/sublane reduce + SMEM store per core.
        out_ref[0, 0] = jnp.sum(acc_ref[...])


def focal_loss(outputs: jax.Array, targets: jax.Array) -> jax.Array:
    """Mean alpha-weighted focal loss. outputs/targets: (B, C, H, W)."""
    assert outputs.shape == targets.shape
    n_total = int(outputs.size)

    num_cores, max_tile_rows, vmem_limit = _chip_config()

    rows_total = _cdiv(n_total, LANES)
    row_align = max(_sublane_multiple(outputs.dtype),
                    _sublane_multiple(targets.dtype))
    tile_rows = min(max_tile_rows,
                    _round_up(max(_cdiv(rows_total, num_cores), 1), row_align))
    num_tiles = max(_cdiv(rows_total, num_cores * tile_rows), 1)
    padded_rows = num_cores * num_tiles * tile_rows
    padded_elems = padded_rows * LANES

    x_flat = outputs.reshape(-1)
    t_flat = targets.reshape(-1)
    if padded_elems != n_total:
        # Loss-neutral pad (focal == 0 exactly): no masking inside the kernel.
        pad = padded_elems - n_total
        x_flat = jnp.pad(x_flat, (0, pad), constant_values=_PAD_X)
        t_flat = jnp.pad(t_flat, (0, pad), constant_values=_PAD_T)
    x2d = x_flat.reshape(padded_rows, LANES)
    t2d = t_flat.reshape(padded_rows, LANES)

    kernel = functools.partial(
        _focal_loss_kernel, tile_rows=tile_rows, num_tiles=num_tiles)

    in_map = lambda c, i: (c * num_tiles + i, 0)

    partials = pl.pallas_call(
        kernel,
        out_shape=jax.ShapeDtypeStruct((num_cores, 1), jnp.float32),
        grid_spec=pltpu.PrefetchScalarGridSpec(
            num_scalar_prefetch=0,
            grid=(num_cores, num_tiles),
            in_specs=[
                pl.BlockSpec((tile_rows, LANES), in_map),
                pl.BlockSpec((tile_rows, LANES), in_map),
            ],
            out_specs=pl.BlockSpec((1, 1), lambda c, i: (c, 0),
                                   memory_space=pltpu.SMEM),
            scratch_shapes=[pltpu.VMEM((8, LANES), jnp.float32)],
        ),
        compiler_params=pltpu.CompilerParams(
            dimension_semantics=("parallel", "arbitrary"),
            vmem_limit_bytes=vmem_limit),
    )(x2d, t2d)

    return jnp.sum(partials) / jnp.float32(n_total)


def _focal_loss_ref(outputs, targets):
    """Pure-JAX reference mirroring the PyTorch module."""
    x = outputs.reshape(outputs.shape[1], -1).astype(jnp.float32)
    t = targets.reshape(targets.shape[1], -1).astype(jnp.float32)
    bce = jnp.maximum(x, 0.0) - x * t + jnp.log1p(jnp.exp(-jnp.abs(x)))
    pt = jnp.exp(-bce)
    alpha_w = (1.0 - F_ALPHA) * t + F_ALPHA * (1.0 - t)
    focal = alpha_w * (1.0 - pt) ** F_GAMMA * bce
    return jnp.mean(focal)


if __name__ == "__main__":
    key = jax.random.PRNGKey(0)
    k1, k2 = jax.random.split(key)

    # Aligned f32 case (no padding path).
    B, C, H, W = 2, 4, 16, 16
    outputs = jax.random.normal(k1, (B, C, H, W), dtype=jnp.float32)
    targets = (jax.random.uniform(k2, (B, C, H, W)) > 0.5).astype(jnp.float32)

    loss = focal_loss(outputs, targets)
    jax.block_until_ready(loss)
    ref = _focal_loss_ref(outputs, targets)
    assert jnp.allclose(loss, ref, rtol=1e-5, atol=1e-6), (loss, ref)

    # Non-tile-aligned shape exercises the loss-neutral padding path.
    B2, C2, H2, W2 = 1, 3, 13, 17
    o2 = jax.random.normal(k1, (B2, C2, H2, W2), dtype=jnp.float32)
    t2 = (jax.random.uniform(k2, (B2, C2, H2, W2)) > 0.5).astype(jnp.float32)
    loss2 = focal_loss(o2, t2)
    jax.block_until_ready(loss2)
    ref2 = _focal_loss_ref(o2, t2)
    assert jnp.allclose(loss2, ref2, rtol=1e-5, atol=1e-6), (loss2, ref2)

    # bf16 logits / targets fed straight to the kernel (no wrapper upcast):
    # halves HBM bytes per element on the memory-bound generations.
    o3 = outputs.astype(jnp.bfloat16)
    t3 = targets.astype(jnp.bfloat16)
    loss3 = focal_loss(o3, t3)
    jax.block_until_ready(loss3)
    ref3 = _focal_loss_ref(o3, t3)
    assert jnp.allclose(loss3, ref3, rtol=1e-4, atol=1e-5), (loss3, ref3)

    print("KERNEL_OK")
</pallas_src>

<mosaic_0001>
module attributes {stable_mosaic.version = 11 : i64} {
  func.func @_focal_loss_kernel(%arg0: i32, %arg1: i32, %arg2: memref<16x128xf32, #tpu.memory_space<vmem>>, %arg3: memref<16x128xf32, #tpu.memory_space<vmem>>, %arg4: memref<1x1xf32, #tpu.memory_space<smem>>, %arg5: memref<8x128xf32, #tpu.memory_space<vmem>>) attributes {dimension_semantics = [#tpu.dimension_semantics<parallel>, #tpu.dimension_semantics<arbitrary>], iteration_bounds = array<i64: 1, 1>, scalar_prefetch = 0 : i64, scratch_operands = 1 : i64, tpu.core_type = #tpu.core_type<tc>, window_params = [{transform_indices = @transform_0, window_bounds = array<i64: 16, 128>}, {transform_indices = @transform_1, window_bounds = array<i64: 16, 128>}, {transform_indices = @transform_2, window_bounds = array<i64: 1, 1>}]} {
    %c0_i32 = arith.constant 0 : i32
    %0 = arith.cmpi eq, %arg1, %c0_i32 : i32
    %1 = arith.extui %0 : i1 to i32
    %c0_i32_0 = arith.constant 0 : i32
    %2 = arith.cmpi ne, %1, %c0_i32_0 : i32
    scf.if %2 {
      %cst_17 = arith.constant 0.000000e+00 : f32
      %38 = vector.broadcast %cst_17 : f32 to vector<8x128xf32>
      %c0_18 = arith.constant 0 : index
      %c0_19 = arith.constant 0 : index
      %39 = vector.load %arg5[%c0_18, %c0_19] : memref<8x128xf32, #tpu.memory_space<vmem>>, vector<8x128xf32>
      tpu.vector_store %arg5[%c0_18, %c0_19], %38 {strides = array<i32>} : memref<8x128xf32, #tpu.memory_space<vmem>>, vector<8x128xf32>,
    } else {
    }
    %c0 = arith.constant 0 : index
    %c0_1 = arith.constant 0 : index
    %3 = vector.load %arg2[%c0, %c0_1] : memref<16x128xf32, #tpu.memory_space<vmem>>, vector<16x128xf32>
    %c0_2 = arith.constant 0 : index
    %c0_3 = arith.constant 0 : index
    %4 = vector.load %arg3[%c0_2, %c0_3] : memref<16x128xf32, #tpu.memory_space<vmem>>, vector<16x128xf32>
    %cst = arith.constant 0.000000e+00 : f32
    %5 = vector.broadcast %cst : f32 to vector<16x128xf32>
    %6 = arith.maximumf %3, %5 : vector<16x128xf32>
    %7 = arith.mulf %3, %4 : vector<16x128xf32>
    %8 = arith.subf %6, %7 : vector<16x128xf32>
    %9 = math.absf %3 : vector<16x128xf32>
    %cst_4 = arith.constant 0.000000e+00 : f32
    %10 = vector.broadcast %cst_4 : f32 to vector<16x128xf32>
    %11 = arith.subf %10, %9 : vector<16x128xf32>
    %12 = math.exp %11 : vector<16x128xf32>
    %13 = math.log1p %12 : vector<16x128xf32>
    %14 = arith.addf %8, %13 : vector<16x128xf32>
    %cst_5 = arith.constant 0.000000e+00 : f32
    %15 = vector.broadcast %cst_5 : f32 to vector<16x128xf32>
    %16 = arith.subf %15, %14 : vector<16x128xf32>
    %17 = math.exp %16 : vector<16x128xf32>
    %cst_6 = arith.constant 7.500000e-01 : f32
    %18 = vector.broadcast %cst_6 : f32 to vector<16x128xf32>
    %19 = arith.mulf %18, %4 : vector<16x128xf32>
    %cst_7 = arith.constant 1.000000e+00 : f32
    %20 = vector.broadcast %cst_7 : f32 to vector<16x128xf32>
    %21 = arith.subf %20, %4 : vector<16x128xf32>
    %cst_8 = arith.constant 2.500000e-01 : f32
    %22 = vector.broadcast %cst_8 : f32 to vector<16x128xf32>
    %23 = arith.mulf %22, %21 : vector<16x128xf32>
    %24 = arith.addf %19, %23 : vector<16x128xf32>
    %cst_9 = arith.constant 1.000000e+00 : f32
    %25 = vector.broadcast %cst_9 : f32 to vector<16x128xf32>
    %26 = arith.subf %25, %17 : vector<16x128xf32>
    %27 = arith.mulf %26, %26 : vector<16x128xf32>
    %28 = arith.mulf %24, %27 : vector<16x128xf32>
    %29 = arith.mulf %28, %14 : vector<16x128xf32>
    %c0_10 = arith.constant 0 : index
    %c0_11 = arith.constant 0 : index
    %30 = vector.load %arg5[%c0_10, %c0_11] : memref<8x128xf32, #tpu.memory_space<vmem>>, vector<8x128xf32>
    %31 = vector.shape_cast %29 : vector<16x128xf32> to vector<2x8x128xf32>
    %cst_12 = arith.constant dense<0.000000e+00> : vector<8x128xf32>
    %32 = vector.multi_reduction <add>, %31, %cst_12 [0] : vector<2x8x128xf32> to vector<8x128xf32>
    %33 = arith.addf %30, %32 : vector<8x128xf32>
    %c0_13 = arith.constant 0 : index
    %c0_14 = arith.constant 0 : index
    %34 = vector.load %arg5[%c0_13, %c0_14] : memref<8x128xf32, #tpu.memory_space<vmem>>, vector<8x128xf32>
    tpu.vector_store %arg5[%c0_13, %c0_14], %33 {strides = array<i32>} : memref<8x128xf32, #tpu.memory_space<vmem>>, vector<8x128xf32>,
    %c0_i32_15 = arith.constant 0 : i32
    %35 = arith.cmpi eq, %arg1, %c0_i32_15 : i32
    %36 = arith.extui %35 : i1 to i32
    %c0_i32_16 = arith.constant 0 : i32
    %37 = arith.cmpi ne, %36, %c0_i32_16 : i32
    scf.if %37 {
      %c0_17 = arith.constant 0 : index
      %c0_18 = arith.constant 0 : index
      %38 = vector.load %arg5[%c0_17, %c0_18] : memref<8x128xf32, #tpu.memory_space<vmem>>, vector<8x128xf32>
      %39 = vector.shape_cast %38 : vector<8x128xf32> to vector<1x8x128xf32>
      %cst_19 = arith.constant dense<0.000000e+00> : vector<1xf32>
      %40 = vector.multi_reduction <add>, %39, %cst_19 [1, 2] : vector<1x8x128xf32> to vector<1xf32>
      %41 = vector.shape_cast %40 : vector<1xf32> to vector<1x1x1xf32>
      %42 = vector.extract %41[0, 0, 0] : f32 from vector<1x1x1xf32>
      %c0_20 = arith.constant 0 : index
      %c0_21 = arith.constant 0 : index
      %43 = memref.load %arg4[%c0_20, %c0_21] : memref<1x1xf32, #tpu.memory_space<smem>>
      memref.store %42, %arg4[%c0_20, %c0_21] : memref<1x1xf32, #tpu.memory_space<smem>>
    } else {
    }
    return
  }
  func.func @transform_0(%arg0: i32, %arg1: i32) -> (i32, i32) {
    %c1_i32 = arith.constant 1 : i32
    %0 = arith.muli %arg0, %c1_i32 : i32
    %1 = arith.addi %0, %arg1 : i32
    %c0_i32 = arith.constant 0 : i32
    %c0_i32_0 = arith.constant 0 : i32
    return %1, %c0_i32 : i32, i32
  }
  func.func @transform_1(%arg0: i32, %arg1: i32) -> (i32, i32) {
    %c1_i32 = arith.constant 1 : i32
    %0 = arith.muli %arg0, %c1_i32 : i32
    %1 = arith.addi %0, %arg1 : i32
    %c0_i32 = arith.constant 0 : i32
    %c0_i32_0 = arith.constant 0 : i32
    return %1, %c0_i32 : i32, i32
  }
  func.func @transform_2(%arg0: i32, %arg1: i32) -> (i32, i32) {
    %c0_i32 = arith.constant 0 : i32
    %c0_i32_0 = arith.constant 0 : i32
    return %arg0, %c0_i32 : i32, i32
  }
}

</mosaic_0001>

<llo_original>
// kernel: tpu_custom_call.1
$region0: #{tpu_custom_call.1}
  #allocation0 [shape = 'u32[]', space=smem, size = 0x4, offset = 0x4, fixed_abs, tag = 'smem constant byte address 0x4 - core index']
  #allocation1 [shape = 'u32[72,128]{1,0:T(1,128)}', space=vmem, size = 0x9000, scoped, tag = 'internal scratch']
  #allocation2 [shape = 'f32[8,128]{1,0:T(8,128)}', space=vmem, size = 0x1000, scoped, tag = 'scratch operand']
  %s0 = inlined_call_operand.hbm [shape: f32[16,128], index: 0, kind: input, shape index: {}]
  %s1 = inlined_call_operand.hbm [shape: f32[16,128], index: 1, kind: input, shape index: {}]
  %s2 = inlined_call_operand.hbm [shape: f32[1,1], index: 2, kind: output, shape index: {}]
  %s3 = sld [smem:[#allocation0]]
  $region34: #{tpu_custom_call.1} parent=0
    _
  %s5 = ssub.s32 1, %s3
  %s6 = scalar_select 0, %s5, %s3
  $region1: #{tpu_custom_call.1} parent=0
    #allocation3 [shape = 'u8[8192]{0}', space=vmem, size = 0x2000, scoped, tag = 'input window, operand 0, single buffered']
    #allocation4 [shape = 's32[1]{0}', space=sflag, size = 0x4, scoped, tag = 'scoped memory for tpu_custom_call.1']
    #allocation5 [shape = 's32[1]{0}', space=sflag, size = 0x4, scoped, tag = 'scoped memory for tpu_custom_call.1']
    #allocation6 [shape = 'u8[8192]{0}', space=vmem, size = 0x2000, scoped, tag = 'input window, operand 1, single buffered']
    #allocation7 [shape = 's32[1]{0}', space=sflag, size = 0x4, scoped, tag = 'scoped memory for tpu_custom_call.1']
    #allocation8 [shape = 'u8[512]{0}', space=smem, size = 0x200, scoped, tag = 'output window, operand 0, single buffered']
    %7 = vsyncpa [#allocation4], 0
    %8 = vsyncpa [#allocation7], 0
    %9 = vsyncpa [#allocation5], 0
    // Predicated region
    $region2: #{tpu_custom_call.1} parent=1 // pred_check
      _
    $region3: #{tpu_custom_call.1} parent=1 // pred_check_branch
      %11 = sbr.rel (0) target = $region5
    $region4: #{tpu_custom_call.1} parent=1 // pred_region
      %s12 = sadd.s32 0, 0
      %s13 = smul.u32 2, %s12
      %15 = vsyncadd [#allocation4], 0
      %s16 = smul.addr %s13, 8
      %s17 = scalar_lea.hbm %s0, %s16
      %s18 = sshll.u32 %s17, 4
      %s19 = int_to_ptr.hbm [resolvable:$true] %s18
      %s20 = sshll.u32 [#allocation3], 4
      %s21 = int_to_ptr.vmem [resolvable:$true] %s20
      %26 = dma.hbm_to_vmem [thread:$0]  %s19, 256, %s21, [#allocation4], 128, 128, 8
    $region5: #{tpu_custom_call.1} parent=1 // pred_fallthru
      _
    // Predicated region
    $region6: #{tpu_custom_call.1} parent=1 // pred_check
      _
    $region7: #{tpu_custom_call.1} parent=1 // pred_check_branch
      %28 = sbr.rel (0) target = $region9
    $region8: #{tpu_custom_call.1} parent=1 // pred_region
      %s29 = sadd.s32 0, 0
      %s30 = smul.u32 2, %s29
      %32 = vsyncadd [#allocation7], 0
      %s33 = smul.addr %s30, 8
      %s34 = scalar_lea.hbm %s1, %s33
      %s35 = sshll.u32 %s34, 4
      %s36 = int_to_ptr.hbm [resolvable:$true] %s35
      %s37 = sshll.u32 [#allocation6], 4
      %s38 = int_to_ptr.vmem [resolvable:$true] %s37
      %43 = dma.hbm_to_vmem [thread:$0]  %s36, 256, %s38, [#allocation7], 128, 128, 8
    $region9: #{tpu_custom_call.1} parent=1 // pred_fallthru
      _
    // Predicated region
    $region10: #{tpu_custom_call.1} parent=1 // pred_check
      _
    $region11: #{tpu_custom_call.1} parent=1 // pred_check_branch
      %45 = sbr.rel (0) target = $region13
    $region12: #{tpu_custom_call.1} parent=1 // pred_region
      %47 = dma.done [#allocation4], 256
    $region13: #{tpu_custom_call.1} parent=1 // pred_fallthru
      _
    // Predicated region
    $region14: #{tpu_custom_call.1} parent=1 // pred_check
      _
    $region15: #{tpu_custom_call.1} parent=1 // pred_check_branch
      %49 = sbr.rel (0) target = $region17
    $region16: #{tpu_custom_call.1} parent=1 // pred_region
      %51 = dma.done [#allocation7], 256
    $region17: #{tpu_custom_call.1} parent=1 // pred_fallthru
      _
    %s52 = sadd.s32 0, 0
    %s53 = smul.u32 2, %s52
    %s54 = sadd.s32 0, 0
    %s55 = smul.u32 2, %s54
    %p56 = scmp.eq.s32.totalorder 0, 0
    // Predicated region
    $region18: #{tpu_custom_call.1} parent=1 // pred_check
      %p57 = pneg %p56
    $region19: #{tpu_custom_call.1} parent=1 // pred_check_branch
      %59 = sbr.rel (%p57) target = $region21
    $region20: #{tpu_custom_call.1} parent=1 // pred_region
      %60 = vst [vmem:[#allocation2] sm:$0xff] 0.0
    $region21: #{tpu_custom_call.1} parent=1 // pred_fallthru
      _
    %v61 = vld [vmem:[#allocation3] sm:$0xff]
    %v62 = vld [vmem:[#allocation3 + $0x8] sm:$0xff]
    %v63 = vld [vmem:[#allocation6] sm:$0xff]
    %v64 = vld [vmem:[#allocation6 + $0x8] sm:$0xff]
    %v65 = vmax.f32 %v61, 0.0
    %v66 = vmax.f32 %v62, 0.0
    %v67 = vmul.f32 %v61, %v63
    %v68 = vmul.f32 %v62, %v64
    %v69 = vsub.f32 %v65, %v67
    %v70 = vsub.f32 %v66, %v68
    %v71 = vand.u32 2147483647, %v61
    %v72 = vand.u32 2147483647, %v62
    %v73 = vsub.f32 0.0, %v71
    %v74 = vsub.f32 0.0, %v72
    %v75 = vmul.f32 %v73, 1.442695
    %v76 = vpow.pop %v75
    %v77 = vmul.f32 %v74, 1.442695
    %v78 = vpow.pop %v77
    %v79 = vadd.f32 %v76, 1.0
    %v80 = vlog2.pop %v79
    %v81 = vmul.f32 %v80, 0.6931472
    %v82 = vmul.f32 -0.5, %v76
    %v83 = vadd.f32 %v82, 1.0
    %v84 = vmul.f32 %v83, %v76
    %v85 = vand.u32 2147483647, %v76
    %vm86 = vcmp.lt.f32.partialorder %v85, 0.0004427343
    %v87 = vsel %vm86, %v84, %v81
    %v88 = vadd.f32 %v78, 1.0
    %v89 = vlog2.pop %v88
    %v90 = vmul.f32 %v89, 0.6931472
    %v91 = vmul.f32 -0.5, %v78
    %v92 = vadd.f32 %v91, 1.0
    %v93 = vmul.f32 %v92, %v78
    %v94 = vand.u32 2147483647, %v78
    %vm95 = vcmp.lt.f32.partialorder %v94, 0.0004427343
    %v96 = vsel %vm95, %v93, %v90
    %v97 = vadd.f32 %v69, %v87
    %v98 = vadd.f32 %v70, %v96
    %v99 = vsub.f32 0.0, %v97
    %v100 = vsub.f32 0.0, %v98
    %v101 = vmul.f32 %v99, 1.442695
    %v102 = vpow.pop %v101
    %v103 = vmul.f32 %v100, 1.442695
    %v104 = vpow.pop %v103
    %v105 = vmul.f32 %v63, 0.75
    %v106 = vmul.f32 %v64, 0.75
    %v107 = vsub.f32 1.0, %v63
    %v108 = vsub.f32 1.0, %v64
    %v109 = vmul.f32 %v107, 0.25
    %v110 = vmul.f32 %v108, 0.25
    %v111 = vadd.f32 %v105, %v109
    %v112 = vadd.f32 %v106, %v110
    %v113 = vsub.f32 1.0, %v102
    %v114 = vsub.f32 1.0, %v104
    %v115 = vmul.f32 %v113, %v113
    %v116 = vmul.f32 %v114, %v114
    %v117 = vmul.f32 %v111, %v115
    %v118 = vmul.f32 %v112, %v116
    %v119 = vmul.f32 %v117, %v97
    %v120 = vmul.f32 %v118, %v98
    %v121 = vld [vmem:[#allocation2] sm:$0xff]
    %v122 = vadd.f32 %v119, %v120
    %v123 = vadd.f32 %v121, %v122
    %124 = vst [vmem:[#allocation2] sm:$0xff] %v123
    // Predicated region
    $region22: #{tpu_custom_call.1} parent=1 // pred_check
      %p125 = pneg %p56
    $region23: #{tpu_custom_call.1} parent=1 // pred_check_branch
      %127 = sbr.rel (%p125) target = $region25
    $region24: #{tpu_custom_call.1} parent=1 // pred_region
      %v128 = vld [vmem:[#allocation2] sm:$0xff]
      %129 = vadd.xlane.f32.xlu0 %v128
      %v130 = vpop.xlane.xlu0 %129
      %v131 = vrot.slane %v130, 4
      %v132 = vadd.f32 %v130, %v131
      %v133 = vrot.slane %v132, 2
      %v134 = vadd.f32 %v132, %v133
      %v135 = vrot.slane %v134, 1
      %v136 = vadd.f32 %v134, %v135
      %s137 = vtos %v136
      %s138 = scalar_lea.smem [#allocation8], 0
      %139 = sst [smem:[%s138]] %s137
    $region25: #{tpu_custom_call.1} parent=1 // pred_fallthru
      _
    // Predicated region
    $region26: #{tpu_custom_call.1} parent=1 // pred_check
      _
    $region27: #{tpu_custom_call.1} parent=1 // pred_check_branch
      %141 = sbr.rel (0) target = $region29
    $region28: #{tpu_custom_call.1} parent=1 // pred_region
      %143 = vsyncadd [#allocation5], 0
      %s145 = sshll.u32 %s2, 4
      %s146 = int_to_ptr.hbm [resolvable:$true] %s145
      %148 = dma.smem_to_hbm [#allocation8], 16, %s146, [#allocation5]
    $region29: #{tpu_custom_call.1} parent=1 // pred_fallthru
      _
    // Predicated region
    $region30: #{tpu_custom_call.1} parent=1 // pred_check
      _
    $region31: #{tpu_custom_call.1} parent=1 // pred_check_branch
      %150 = sbr.rel (0) target = $region33
    $region32: #{tpu_custom_call.1} parent=1 // pred_region
      %152 = dma.done [#allocation5], 16
    $region33: #{tpu_custom_call.1} parent=1 // pred_fallthru
      _
    %153 = sfence
    %154 = vsyncpa [#allocation4], 1
    %155 = vsyncpa [#allocation7], 1
    %156 = vsyncpa [#allocation5], 1

</llo_original>
